<compile_context>
chip_gen: v7x
topology: tpu7x:2x2x1
jax: 0.10.0
libtpu: 0.0.40
codegen_flags: <defaults>
</compile_context>

<pallas_src>
import functools

import jax
import jax.numpy as jnp
from jax.experimental import pallas as pl
from jax.experimental.pallas import tpu as pltpu


def _round_up(n, m):
    return ((n + m - 1) // m) * m


def _linknet_fused_kernel(x_ref, *refs, n_layers, clamp, compute_dtype):
    """Fused MLP forward on one batch tile.

    x_ref:  [TB, in_dim]                 (unpadded feature width)
    refs:   (w0, b0, w1, b1, ..., o_ref)
    w_i:    [K_i, Npad_i]  pre-transposed; K_0 = in_dim, K_i = round_up(d_i, 8);
            padded rows/cols are exact zeros.
    b_i:    [1, Npad_i]    f32; padded lanes are exact zeros.
    o_ref:  [TB, out_dim]                (unpadded feature width)
    """
    o_ref = refs[-1]
    h = x_ref[...]
    for i in range(n_layers):
        w = refs[2 * i][...]
        b = refs[2 * i + 1][...]
        k = w.shape[0]
        # Activation lanes beyond the logical width are exact zeros (zero
        # weight cols + zero bias lanes survive relu/min(.,1)), and the zero
        # padded weight rows contribute nothing, so slicing the activations
        # down to the weight's 8-aligned K width is exact.
        h_k = h if h.shape[1] == k else h[:, :k]
        # MXU matmul, f32 accumulation; bias broadcast over sublanes (f32).
        h = jnp.dot(h_k.astype(compute_dtype), w.astype(compute_dtype),
                    preferred_element_type=jnp.float32) + b
        if clamp:
            # F.relu then torch.min(x, ones)
            h = jnp.minimum(jnp.maximum(h, 0.0), 1.0)
    # Emit only the logical out_dim lanes (masked vst, cheap at this width).
    o_ref[...] = h[:, :o_ref.shape[-1]].astype(o_ref.dtype)


def _forward_impl(x, flat_params, *, arr_dim, clamp, param_dtype, tile_b):
    batch, in_dim = x.shape
    assert in_dim == arr_dim[0], (
        f"LinkNet expects {arr_dim[0]} input features, got {in_dim}")
    n_layers = len(arr_dim) - 1
    out_dim = arr_dim[-1]

    # Batch tile: >= 256 recommended for the HBM-bound regime; never larger
    # than the (8-rounded) batch so tiny batches stay a single block.
    tb = min(tile_b, _round_up(batch, 8))
    grid = (pl.cdiv(batch, tb),)

    kernel = functools.partial(
        _linknet_fused_kernel, n_layers=n_layers, clamp=clamp,
        compute_dtype=param_dtype)

    # Input tile: (tb, in_dim).  in_dim equals the full last dim -> exempt
    # from the 128-lane divisibility rule; tb is a multiple of 8.
    in_specs = [pl.BlockSpec((tb, in_dim), lambda i: (i, 0))]
    # Params: whole-array, grid-invariant (constant index_map -> no re-DMA).
    for p in flat_params:
        in_specs.append(pl.BlockSpec(p.shape, lambda i: (0, 0)))
    out_spec = pl.BlockSpec((tb, out_dim), lambda i: (i, 0))

    flops = 2 * batch * sum(arr_dim[i] * arr_dim[i + 1] for i in range(n_layers))
    param_bytes = sum(int(p.size) * p.dtype.itemsize for p in flat_params)
    bytes_accessed = (batch * in_dim + batch * out_dim) * 4 + param_bytes

    # VMEM budget: double-buffered I/O tiles + params (kept resident) +
    # per-layer f32 intermediates.  Only override the scoped default when the
    # footprint exceeds the most conservative default (16 MiB on v5e); cap at
    # v7x's 64 MiB physical VMEM.
    max_width = max(_round_up(d, 128) for d in arr_dim[1:])
    vmem_est = (2 * tb * (in_dim + out_dim) * 4
                + 2 * param_bytes
                + 4 * tb * max_width * 4)
    compiler_kwargs = {"dimension_semantics": ("parallel",)}
    if vmem_est > 16 * 1024 * 1024:
        compiler_kwargs["vmem_limit_bytes"] = min(int(vmem_est), 64 * 1024 * 1024)

    return pl.pallas_call(
        kernel,
        out_shape=jax.ShapeDtypeStruct((batch, out_dim), jnp.float32),
        grid=grid,
        in_specs=in_specs,
        out_specs=out_spec,
        compiler_params=pltpu.CompilerParams(**compiler_kwargs),
        cost_estimate=pl.CostEstimate(flops=flops, transcendentals=0,
                                      bytes_accessed=bytes_accessed),
    )(x, *flat_params)


class LinkNetPallas:
    """JAX/Pallas port of the PyTorch LinkNet MLP.

    PyTorch semantics: for every Linear layer fct_i (i = 0 .. len(arrDim)-2):
        x = fct_i(x)
        if clampOutput: x = min(relu(x), 1)
    """

    def __init__(self, arr_dim, clampOutput=True, key=None,
                 param_dtype=jnp.float32, tile_b=512):
        if key is None:
            key = jax.random.PRNGKey(0)
        self.arr_dim = list(arr_dim)
        self.clampOutput = bool(clampOutput)
        self.n_layers = len(arr_dim) - 1
        self.param_dtype = param_dtype

        self.params = []        # unpadded (W [out,in], b [out]) f32 — reference use
        flat_padded = []        # interleaved (w_T_pad, b_pad) for the kernel
        for i in range(self.n_layers):
            fan_in, fan_out = arr_dim[i], arr_dim[i + 1]
            key, kw, kb = jax.random.split(key, 3)
            bound = 1.0 / jnp.sqrt(fan_in)
            # PyTorch nn.Linear default init: U(-1/sqrt(fan_in), 1/sqrt(fan_in))
            w = jax.random.uniform(kw, (fan_out, fan_in), jnp.float32,
                                   minval=-bound, maxval=bound)
            b = jax.random.uniform(kb, (fan_out,), jnp.float32,
                                   minval=-bound, maxval=bound)
            self.params.append((w, b))

            # Pre-transpose.  K (sublane) padded only to 8 (layer 0: exact
            # in_dim since the kernel input is unpadded); N (lane) to 128.
            k_pad = fan_in if i == 0 else _round_up(fan_in, 8)
            out_pad = _round_up(fan_out, 128)
            w_t_pad = jnp.zeros((k_pad, out_pad), param_dtype)
            w_t_pad = w_t_pad.at[:fan_in, :fan_out].set(w.T.astype(param_dtype))
            b_pad = jnp.zeros((1, out_pad), jnp.float32)
            b_pad = b_pad.at[0, :fan_out].set(b)
            flat_padded.extend([w_t_pad, b_pad])

        self.flat_padded = tuple(flat_padded)
        self._forward = jax.jit(
            functools.partial(
                _forward_impl,
                arr_dim=tuple(self.arr_dim),
                clamp=self.clampOutput,
                param_dtype=self.param_dtype,
                tile_b=int(tile_b),
            )
        )

    def __call__(self, x):
        return self._forward(x, self.flat_padded)


def _reference_forward(model, x):
    """Pure-JAX reference of the same forward pass (for sanity check)."""
    h = x
    for (w, b) in model.params:
        if model.param_dtype != jnp.float32:
            # Mirror the kernel's operand rounding (bf16 operands, f32 accum).
            w_eff = w.astype(model.param_dtype).astype(jnp.float32)
            h_eff = h.astype(model.param_dtype).astype(jnp.float32)
        else:
            w_eff, h_eff = w, h
        h = h_eff @ w_eff.T + b
        if model.clampOutput:
            h = jnp.minimum(jax.nn.relu(h), 1.0)
    return h


if __name__ == "__main__":
    key = jax.random.PRNGKey(0)
    key, kx, kxb, kp1, kp2, kp3 = jax.random.split(key, 6)

    arr_dim = [32, 64, 16, 8]   # 3 Linear layers: 32->64->16->8
    batch = 8
    x = jax.random.normal(kx, (batch, arr_dim[0]), jnp.float32)

    # 1) clampOutput=True, f32 params (bit-faithful to the PyTorch module).
    m1 = LinkNetPallas(arr_dim, clampOutput=True, key=kp1)
    o1 = jax.block_until_ready(m1(x))
    r1 = _reference_forward(m1, x)
    assert o1.shape == (batch, arr_dim[-1])
    assert jnp.allclose(o1, r1, atol=1e-5, rtol=1e-5)

    # 2) clampOutput=False: plain stacked Linear layers, no activation.
    m2 = LinkNetPallas(arr_dim, clampOutput=False, key=kp2)
    o2 = jax.block_until_ready(m2(x))
    r2 = _reference_forward(m2, x)
    assert o2.shape == (batch, arr_dim[-1])
    assert jnp.allclose(o2, r2, atol=1e-5, rtol=1e-5)

    # 3) Batch-tiled path: grid > 1 with a ragged last block (200 rows, TB=64).
    xb = jax.random.normal(kxb, (200, arr_dim[0]), jnp.float32)
    m3 = LinkNetPallas(arr_dim, clampOutput=True, key=kp1, tile_b=64)
    o3 = jax.block_until_ready(m3(xb))
    r3 = _reference_forward(m3, xb)
    assert o3.shape == (200, arr_dim[-1])
    assert jnp.allclose(o3, r3, atol=1e-5, rtol=1e-5)

    # 4) bf16 weights (native v6e/v7x MXU path); tolerance relaxed vs. the
    #    bf16-operand-mirroring f32 reference.
    m4 = LinkNetPallas(arr_dim, clampOutput=True, key=kp3,
                       param_dtype=jnp.bfloat16)
    o4 = jax.block_until_ready(m4(x))
    r4 = _reference_forward(m4, x)
    assert jnp.allclose(o4, r4, atol=1e-3, rtol=1e-3)

    print("KERNEL_OK")
</pallas_src>

<mosaic_0001>
module attributes {stable_mosaic.version = 11 : i64} {
  func.func @_linknet_fused_kernel(%arg0: i32, %arg1: memref<8x32xf32, #tpu.memory_space<vmem>>, %arg2: memref<32x128xf32, #tpu.memory_space<vmem>>, %arg3: memref<1x128xf32, #tpu.memory_space<vmem>>, %arg4: memref<64x128xf32, #tpu.memory_space<vmem>>, %arg5: memref<1x128xf32, #tpu.memory_space<vmem>>, %arg6: memref<16x128xf32, #tpu.memory_space<vmem>>, %arg7: memref<1x128xf32, #tpu.memory_space<vmem>>, %arg8: memref<8x8xf32, #tpu.memory_space<vmem>>) attributes {dimension_semantics = [#tpu.dimension_semantics<parallel>], iteration_bounds = array<i64: 1>, scalar_prefetch = 0 : i64, scratch_operands = 0 : i64, tpu.core_type = #tpu.core_type<tc>, window_params = [{transform_indices = @transform_0, window_bounds = array<i64: 8, 32>}, {pipeline_mode = #tpu.pipeline_mode<synchronous>, transform_indices = @transform_1, window_bounds = array<i64: 32, 128>}, {pipeline_mode = #tpu.pipeline_mode<synchronous>, transform_indices = @transform_2, window_bounds = array<i64: 1, 128>}, {pipeline_mode = #tpu.pipeline_mode<synchronous>, transform_indices = @transform_3, window_bounds = array<i64: 64, 128>}, {pipeline_mode = #tpu.pipeline_mode<synchronous>, transform_indices = @transform_4, window_bounds = array<i64: 1, 128>}, {pipeline_mode = #tpu.pipeline_mode<synchronous>, transform_indices = @transform_5, window_bounds = array<i64: 16, 128>}, {pipeline_mode = #tpu.pipeline_mode<synchronous>, transform_indices = @transform_6, window_bounds = array<i64: 1, 128>}, {transform_indices = @transform_7, window_bounds = array<i64: 8, 8>}]} {
    %c0 = arith.constant 0 : index
    %c0_0 = arith.constant 0 : index
    %0 = vector.load %arg1[%c0, %c0_0] : memref<8x32xf32, #tpu.memory_space<vmem>>, vector<8x32xf32>
    %c0_1 = arith.constant 0 : index
    %c0_2 = arith.constant 0 : index
    %1 = vector.load %arg2[%c0_1, %c0_2] : memref<32x128xf32, #tpu.memory_space<vmem>>, vector<32x128xf32>
    %c0_3 = arith.constant 0 : index
    %c0_4 = arith.constant 0 : index
    %2 = vector.load %arg3[%c0_3, %c0_4] : memref<1x128xf32, #tpu.memory_space<vmem>>, vector<1x128xf32>
    %cst = arith.constant dense<0.000000e+00> : vector<8x128xf32>
    %3 = tpu.matmul %0, %1, %cst {dimension_numbers = #tpu.dot_dimension_numbers<[1], [0], [0], [1], [0, 0, 1, 1], [], []>} : vector<8x32xf32>, vector<32x128xf32>, vector<8x128xf32> -> vector<8x128xf32>
    %4 = vector.broadcast %2 : vector<1x128xf32> to vector<8x128xf32>
    %5 = arith.addf %3, %4 : vector<8x128xf32>
    %cst_5 = arith.constant 0.000000e+00 : f32
    %6 = vector.broadcast %cst_5 : f32 to vector<8x128xf32>
    %7 = arith.maximumf %5, %6 : vector<8x128xf32>
    %cst_6 = arith.constant 1.000000e+00 : f32
    %8 = vector.broadcast %cst_6 : f32 to vector<8x128xf32>
    %9 = arith.minimumf %7, %8 : vector<8x128xf32>
    %c0_7 = arith.constant 0 : index
    %c0_8 = arith.constant 0 : index
    %10 = vector.load %arg4[%c0_7, %c0_8] : memref<64x128xf32, #tpu.memory_space<vmem>>, vector<64x128xf32>
    %c0_9 = arith.constant 0 : index
    %c0_10 = arith.constant 0 : index
    %11 = vector.load %arg5[%c0_9, %c0_10] : memref<1x128xf32, #tpu.memory_space<vmem>>, vector<1x128xf32>
    %12 = vector.extract_strided_slice %9 {offsets = [0, 0], sizes = [8, 64], strides = [1, 1]} : vector<8x128xf32> to vector<8x64xf32>
    %cst_11 = arith.constant dense<0.000000e+00> : vector<8x128xf32>
    %13 = tpu.matmul %12, %10, %cst_11 {dimension_numbers = #tpu.dot_dimension_numbers<[1], [0], [0], [1], [0, 0, 1, 1], [], []>} : vector<8x64xf32>, vector<64x128xf32>, vector<8x128xf32> -> vector<8x128xf32>
    %14 = vector.broadcast %11 : vector<1x128xf32> to vector<8x128xf32>
    %15 = arith.addf %13, %14 : vector<8x128xf32>
    %cst_12 = arith.constant 0.000000e+00 : f32
    %16 = vector.broadcast %cst_12 : f32 to vector<8x128xf32>
    %17 = arith.maximumf %15, %16 : vector<8x128xf32>
    %cst_13 = arith.constant 1.000000e+00 : f32
    %18 = vector.broadcast %cst_13 : f32 to vector<8x128xf32>
    %19 = arith.minimumf %17, %18 : vector<8x128xf32>
    %c0_14 = arith.constant 0 : index
    %c0_15 = arith.constant 0 : index
    %20 = vector.load %arg6[%c0_14, %c0_15] : memref<16x128xf32, #tpu.memory_space<vmem>>, vector<16x128xf32>
    %c0_16 = arith.constant 0 : index
    %c0_17 = arith.constant 0 : index
    %21 = vector.load %arg7[%c0_16, %c0_17] : memref<1x128xf32, #tpu.memory_space<vmem>>, vector<1x128xf32>
    %22 = vector.extract_strided_slice %19 {offsets = [0, 0], sizes = [8, 16], strides = [1, 1]} : vector<8x128xf32> to vector<8x16xf32>
    %cst_18 = arith.constant dense<0.000000e+00> : vector<8x128xf32>
    %23 = tpu.matmul %22, %20, %cst_18 {dimension_numbers = #tpu.dot_dimension_numbers<[1], [0], [0], [1], [0, 0, 1, 1], [], []>} : vector<8x16xf32>, vector<16x128xf32>, vector<8x128xf32> -> vector<8x128xf32>
    %24 = vector.broadcast %21 : vector<1x128xf32> to vector<8x128xf32>
    %25 = arith.addf %23, %24 : vector<8x128xf32>
    %cst_19 = arith.constant 0.000000e+00 : f32
    %26 = vector.broadcast %cst_19 : f32 to vector<8x128xf32>
    %27 = arith.maximumf %25, %26 : vector<8x128xf32>
    %cst_20 = arith.constant 1.000000e+00 : f32
    %28 = vector.broadcast %cst_20 : f32 to vector<8x128xf32>
    %29 = arith.minimumf %27, %28 : vector<8x128xf32>
    %30 = vector.extract_strided_slice %29 {offsets = [0, 0], sizes = [8, 8], strides = [1, 1]} : vector<8x128xf32> to vector<8x8xf32>
    %c0_21 = arith.constant 0 : index
    %c0_22 = arith.constant 0 : index
    %31 = vector.load %arg8[%c0_21, %c0_22] : memref<8x8xf32, #tpu.memory_space<vmem>>, vector<8x8xf32>
    tpu.vector_store %arg8[%c0_21, %c0_22], %30 {strides = array<i32>} : memref<8x8xf32, #tpu.memory_space<vmem>>, vector<8x8xf32>,
    return
  }
  func.func @transform_0(%arg0: i32) -> (i32, i32) {
    %c0_i32 = arith.constant 0 : i32
    %c0_i32_0 = arith.constant 0 : i32
    return %arg0, %c0_i32 : i32, i32
  }
  func.func @transform_1(%arg0: i32) -> (i32, i32) {
    %c0_i32 = arith.constant 0 : i32
    %c0_i32_0 = arith.constant 0 : i32
    %c0_i32_1 = arith.constant 0 : i32
    return %c0_i32, %c0_i32_0 : i32, i32
  }
  func.func @transform_2(%arg0: i32) -> (i32, i32) {
    %c0_i32 = arith.constant 0 : i32
    %c0_i32_0 = arith.constant 0 : i32
    %c0_i32_1 = arith.constant 0 : i32
    return %c0_i32, %c0_i32_0 : i32, i32
  }
  func.func @transform_3(%arg0: i32) -> (i32, i32) {
    %c0_i32 = arith.constant 0 : i32
    %c0_i32_0 = arith.constant 0 : i32
    %c0_i32_1 = arith.constant 0 : i32
    return %c0_i32, %c0_i32_0 : i32, i32
  }
  func.func @transform_4(%arg0: i32) -> (i32, i32) {
    %c0_i32 = arith.constant 0 : i32
    %c0_i32_0 = arith.constant 0 : i32
    %c0_i32_1 = arith.constant 0 : i32
    return %c0_i32, %c0_i32_0 : i32, i32
  }
  func.func @transform_5(%arg0: i32) -> (i32, i32) {
    %c0_i32 = arith.constant 0 : i32
    %c0_i32_0 = arith.constant 0 : i32
    %c0_i32_1 = arith.constant 0 : i32
    return %c0_i32, %c0_i32_0 : i32, i32
  }
  func.func @transform_6(%arg0: i32) -> (i32, i32) {
    %c0_i32 = arith.constant 0 : i32
    %c0_i32_0 = arith.constant 0 : i32
    %c0_i32_1 = arith.constant 0 : i32
    return %c0_i32, %c0_i32_0 : i32, i32
  }
  func.func @transform_7(%arg0: i32) -> (i32, i32) {
    %c0_i32 = arith.constant 0 : i32
    %c0_i32_0 = arith.constant 0 : i32
    return %arg0, %c0_i32 : i32, i32
  }
}

</mosaic_0001>

<llo_original>
// kernel: _forward_impl.1
$region0: #{_forward_impl.1}
  #allocation0 [shape = 'u32[]', space=smem, size = 0x4, offset = 0x4, fixed_abs, tag = 'smem constant byte address 0x4 - core index']
  #allocation1 [shape = 'u32[144,128]{1,0:T(1,128)}', space=vmem, size = 0x12000, scoped, tag = 'internal scratch']
  %s0 = inlined_call_operand.hbm [shape: f32[8,32], index: 0, kind: input, shape index: {}]
  %s1 = inlined_call_operand.hbm [shape: f32[32,128], index: 1, kind: input, shape index: {}]
  %s2 = inlined_call_operand.vmem [shape: f32[1,128], index: 2, kind: input, shape index: {}]
  %s3 = inlined_call_operand.hbm [shape: f32[64,128], index: 3, kind: input, shape index: {}]
  %s4 = inlined_call_operand.vmem [shape: f32[1,128], index: 4, kind: input, shape index: {}]
  %s5 = inlined_call_operand.vmem [shape: f32[16,128], index: 5, kind: input, shape index: {}]
  %s6 = inlined_call_operand.vmem [shape: f32[1,128], index: 6, kind: input, shape index: {}]
  %s7 = inlined_call_operand.hbm [shape: f32[8,8], index: 7, kind: output, shape index: {}]
  %s8 = sld [smem:[#allocation0]]
  $region50: #{_forward_impl.1} parent=0
    _
  %s10 = ssub.s32 1, %s8
  %s11 = scalar_select 0, %s10, %s8
  $region1: #{_forward_impl.1} parent=0
    #allocation2 [shape = 'u8[4096]{0}', space=vmem, size = 0x1000, scoped, tag = 'input window, operand 0, single buffered']
    #allocation3 [shape = 's32[1]{0}', space=sflag, size = 0x4, scoped, tag = 'scoped memory for _forward_impl.1']
    #allocation4 [shape = 's32[1]{0}', space=sflag, size = 0x4, scoped, tag = 'scoped memory for _forward_impl.1']
    #allocation5 [shape = 'u8[16384]{0}', space=vmem, size = 0x4000, scoped, tag = 'input window, operand 1, single buffered']
    #allocation6 [shape = 's32[1]{0}', space=sflag, size = 0x4, scoped, tag = 'scoped memory for _forward_impl.1']
    #allocation7 [shape = 'u8[32768]{0}', space=vmem, size = 0x8000, scoped, tag = 'input window, operand 3, single buffered']
    #allocation8 [shape = 'u8[4096]{0}', space=vmem, size = 0x1000, scoped, tag = 'output window, operand 0, single buffered']
    %12 = vsyncpa [#allocation3], 0
    %13 = vsyncpa [#allocation6], 0
    %14 = vsyncpa [#allocation4], 0
    // Predicated region
    $region2: #{_forward_impl.1} parent=1 // pred_check
      _
    $region3: #{_forward_impl.1} parent=1 // pred_check_branch
      %16 = sbr.rel (0) target = $region5
    $region4: #{_forward_impl.1} parent=1 // pred_region
      %s18 = ssub.s32 128, 128
      %19 = vsyncadd [#allocation3], %s18
      %s21 = sshll.u32 [#allocation2], 4
      %s22 = int_to_ptr.vmem [resolvable:$true] %s21
      %24 = dma.hbm_to_vmem [thread:$0]  %s0, 128, %s22, [#allocation3]
    $region5: #{_forward_impl.1} parent=1 // pred_fallthru
      _
    // Predicated region
    $region6: #{_forward_impl.1} parent=1 // pred_check
      _
    $region7: #{_forward_impl.1} parent=1 // pred_check_branch
      %26 = sbr.rel (0) target = $region9
    $region8: #{_forward_impl.1} parent=1 // pred_region
      %s28 = ssub.s32 512, 512
      %29 = vsyncadd [#allocation6], %s28
      %s30 = sshll.u32 [#allocation5], 4
      %s31 = int_to_ptr.vmem [resolvable:$true] %s30
      %36 = dma.hbm_to_vmem [thread:$0]  %s1, 512, %s31, [#allocation6], 128, 128, 8
    $region9: #{_forward_impl.1} parent=1 // pred_fallthru
      _
    // Predicated region
    $region10: #{_forward_impl.1} parent=1 // pred_check
      _
    $region11: #{_forward_impl.1} parent=1 // pred_check_branch
      %38 = sbr.rel (0) target = $region13
    $region12: #{_forward_impl.1} parent=1 // pred_region
      _
    $region13: #{_forward_impl.1} parent=1 // pred_fallthru
      _
    // Predicated region
    $region14: #{_forward_impl.1} parent=1 // pred_check
      _
    $region15: #{_forward_impl.1} parent=1 // pred_check_branch
      %40 = sbr.rel (0) target = $region17
    $region16: #{_forward_impl.1} parent=1 // pred_region
      %s42 = ssub.s32 1024, 1024
      %43 = vsyncadd [#allocation6], %s42
      %s44 = sshll.u32 [#allocation7], 4
      %s45 = int_to_ptr.vmem [resolvable:$true] %s44
      %50 = dma.hbm_to_vmem [thread:$0]  %s3, 1024, %s45, [#allocation6], 128, 128, 8
    $region17: #{_forward_impl.1} parent=1 // pred_fallthru
      _
    // Predicated region
    $region18: #{_forward_impl.1} parent=1 // pred_check
      _
    $region19: #{_forward_impl.1} parent=1 // pred_check_branch
      %52 = sbr.rel (0) target = $region21
    $region20: #{_forward_impl.1} parent=1 // pred_region
      _
    $region21: #{_forward_impl.1} parent=1 // pred_fallthru
      _
    // Predicated region
    $region22: #{_forward_impl.1} parent=1 // pred_check
      _
    $region23: #{_forward_impl.1} parent=1 // pred_check_branch
      %54 = sbr.rel (0) target = $region25
    $region24: #{_forward_impl.1} parent=1 // pred_region
      _
    $region25: #{_forward_impl.1} parent=1 // pred_fallthru
      _
    // Predicated region
    $region26: #{_forward_impl.1} parent=1 // pred_check
      _
    $region27: #{_forward_impl.1} parent=1 // pred_check_branch
      %56 = sbr.rel (0) target = $region29
    $region28: #{_forward_impl.1} parent=1 // pred_region
      _
    $region29: #{_forward_impl.1} parent=1 // pred_fallthru
      _
    // Predicated region
    $region30: #{_forward_impl.1} parent=1 // pred_check
      _
    $region31: #{_forward_impl.1} parent=1 // pred_check_branch
      %58 = sbr.rel (0) target = $region33
    $region32: #{_forward_impl.1} parent=1 // pred_region
      %59 = dma.done [#allocation3], 128
    $region33: #{_forward_impl.1} parent=1 // pred_fallthru
      _
    // Predicated region
    $region34: #{_forward_impl.1} parent=1 // pred_check
      _
    $region35: #{_forward_impl.1} parent=1 // pred_check_branch
      %61 = sbr.rel (0) target = $region37
    $region36: #{_forward_impl.1} parent=1 // pred_region
      %62 = dma.done [#allocation6], 512
    $region37: #{_forward_impl.1} parent=1 // pred_fallthru
      _
    // Predicated region
    $region38: #{_forward_impl.1} parent=1 // pred_check
      _
    $region39: #{_forward_impl.1} parent=1 // pred_check_branch
      %64 = sbr.rel (0) target = $region41
    $region40: #{_forward_impl.1} parent=1 // pred_region
      %65 = dma.done [#allocation6], 1024
    $region41: #{_forward_impl.1} parent=1 // pred_fallthru
      _
    %v66 = vld [vmem:[#allocation2] sm:$0xff]
    %v67 = vld [vmem:[#allocation5] sm:$0xff]
    %v68 = vld [vmem:[#allocation5 + $0x8] sm:$0xff]
    %v69 = vld [vmem:[#allocation5 + $0x10] sm:$0xff]
    %v70 = vld [vmem:[#allocation5 + $0x18] sm:$0xff]
    %v71 = vld [vmem:[%s2] sm:$0x1]
    %v73 = vlaneseq
    %v74 = vshrl.u32 %v73, 7
    %v75 = vsub.s32 0, %v74
    %v76 = vrot.slane %v71, %v75
    %vm78 = vcmask 261120
    %v80 = vsel %vm78, %v66, 0
    %82 = vmatprep.subr.mxu0 0.0
    %83 = vmatpush1.msra.mxu0 %v67
    %84 = vmatprep.subr.mxu0 0.0
    %85 = vmatpush1.msra.mxu0 %v68
    %86 = vmatprep.subr.mxu0 0.0
    %87 = vmatpush1.msra.mxu0 %v69
    %88 = vmatprep.subr.mxu0 0.0
    %89 = vmatpush1.msra.mxu0 %v70
    %90 = vmatprep.subr.mxu0 0.0
    %91 = vmatpush1.msra.mxu0 0.0
    %92 = vmatprep.subr.mxu0 0.0
    %93 = vmatpush1.msra.mxu0 0.0
    %94 = vmatprep.subr.mxu0 0.0
    %95 = vmatpush1.msra.mxu0 0.0
    %96 = vmatprep.subr.mxu0 0.0
    %97 = vmatpush1.msra.mxu0 0.0
    %98 = vmatprep.subr.mxu0 0.0
    %99 = vmatpush1.msra.mxu0 0.0
    %100 = vmatprep.subr.mxu0 0.0
    %101 = vmatpush1.msra.mxu0 0.0
    %102 = vmatprep.subr.mxu0 0.0
    %103 = vmatpush1.msra.mxu0 0.0
    %104 = vmatprep.subr.mxu0 0.0
    %105 = vmatpush1.msra.mxu0 0.0
    %106 = vmatprep.subr.mxu0 0.0
    %107 = vmatpush1.msra.mxu0 0.0
    %108 = vmatprep.subr.mxu0 0.0
    %109 = vmatpush1.msra.mxu0 0.0
    %110 = vmatprep.subr.mxu0 0.0
    %111 = vmatpush1.msra.mxu0 0.0
    %112 = vmatprep.subr.mxu0 0.0
    %113 = vmatpush1.msra.mxu0 0.0
    %114 = vmatprep.subr.mxu0 0.0
    %115 = vmatpush1.msra.mxu0 0.0
    %116 = vmatprep.subr.mxu0 0.0
    %117 = vmatpush1.msra.mxu0 0.0
    %118 = vmatprep.subr.mxu0 0.0
    %119 = vmatpush1.msra.mxu0 0.0
    %120 = vmatprep.subr.mxu0 0.0
    %121 = vmatpush1.msra.mxu0 0.0
    %122 = vmatprep.subr.mxu0 0.0
    %123 = vmatpush1.msra.mxu0 0.0
    %124 = vmatprep.subr.mxu0 0.0
    %125 = vmatpush1.msra.mxu0 0.0
    %126 = vmatprep.subr.mxu0 0.0
    %127 = vmatpush1.msra.mxu0 0.0
    %128 = vmatprep.subr.mxu0 0.0
    %129 = vmatpush1.msra.mxu0 0.0
    %130 = vmatprep.subr.mxu0 0.0
    %131 = vmatpush1.msra.mxu0 0.0
    %132 = vmatprep.subr.mxu0 0.0
    %133 = vmatpush1.msra.mxu0 0.0
    %134 = vmatprep.subr.mxu0 0.0
    %135 = vmatpush1.msra.mxu0 0.0
    %136 = vmatprep.subr.mxu0 0.0
    %137 = vmatpush1.msra.mxu0 0.0
    %138 = vmatprep.subr.mxu0 0.0
    %139 = vmatpush1.msra.mxu0 0.0
    %140 = vmatprep.subr.mxu0 0.0
    %141 = vmatpush1.msra.mxu0 0.0
    %142 = vmatprep.subr.mxu0 0.0
    %143 = vmatpush1.msra.mxu0 0.0
    %144 = vmatprep.subr.mxu0 0.0
    %145 = vmatpush1.msra.mxu0 0.0
    %146 = vmatprep.mubr.f32.mxu0 0.0
    %147 = vmatmul.mubr.f32.gmra.mrb[0].mxu0 %v80
    %v148 = vpop.f32.mrb[0].mxu0
    %v149 = vadd.f32 %v76, %v148
    %v150 = vpop.f32.mrb[0].mxu0
    %151 = vdwg.mxu0
    %v152 = vmax.f32 %v149, 0.0
    %v153 = vmin.f32 %v152, 1.0
    %v154 = vld [vmem:[#allocation7] sm:$0xff]
    %v155 = vld [vmem:[#allocation7 + $0x8] sm:$0xff]
    %v156 = vld [vmem:[#allocation7 + $0x10] sm:$0xff]
    %v157 = vld [vmem:[#allocation7 + $0x18] sm:$0xff]
    %v158 = vld [vmem:[#allocation7 + $0x20] sm:$0xff]
    %v159 = vld [vmem:[#allocation7 + $0x28] sm:$0xff]
    %v160 = vld [vmem:[#allocation7 + $0x30] sm:$0xff]
    %v161 = vld [vmem:[#allocation7 + $0x38] sm:$0xff]
    %v162 = vld [vmem:[%s4] sm:$0x1]
    %v164 = vlaneseq
    %v165 = vshrl.u32 %v164, 7
    %v166 = vsub.s32 0, %v165
    %v167 = vrot.slane %v162, %v166
    %vm169 = vcmask 523264
    %v171 = vsel %vm169, %v153, 0
    %173 = vmatprep.subr.mxu0 0.0
    %174 = vmatpush1.msra.mxu0 %v154
    %175 = vmatprep.subr.mxu0 0.0
    %176 = vmatpush1.msra.mxu0 %v155
    %177 = vmatprep.subr.mxu0 0.0
    %178 = vmatpush1.msra.mxu0 %v156
    %179 = vmatprep.subr.mxu0 0.0
    %180 = vmatpush1.msra.mxu0 %v157
    %181 = vmatprep.subr.mxu0 0.0
    %182 = vmatpush1.msra.mxu0 %v158
    %183 = vmatprep.subr.mxu0 0.0
    %184 = vmatpush1.msra.mxu0 %v159
    %185 = vmatprep.subr.mxu0 0.0
    %186 = vmatpush1.msra.mxu0 %v160
    %187 = vmatprep.subr.mxu0 0.0
    %188 = vmatpush1.msra.mxu0 %v161
    %189 = vmatprep.subr.mxu0 0.0
    %190 = vmatpush1.msra.mxu0 0.0
    %191 = vmatprep.subr.mxu0 0.0
    %192 = vmatpush1.msra.mxu0 0.0
    %193 = vmatprep.subr.mxu0 0.0
    %194 = vmatpush1.msra.mxu0 0.0
    %195 = vmatprep.subr.mxu0 0.0
    %196 = vmatpush1.msra.mxu0 0.0
    %197 = vmatprep.subr.mxu0 0.0
    %198 = vmatpush1.msra.mxu0 0.0
    %199 = vmatprep.subr.mxu0 0.0
    %200 = vmatpush1.msra.mxu0 0.0
    %201 = vmatprep.subr.mxu0 0.0
    %202 = vmatpush1.msra.mxu0 0.0
    %203 = vmatprep.subr.mxu0 0.0
    %204 = vmatpush1.msra.mxu0 0.0
    %205 = vmatprep.subr.mxu0 0.0
    %206 = vmatpush1.msra.mxu0 0.0
    %207 = vmatprep.subr.mxu0 0.0
    %208 = vmatpush1.msra.mxu0 0.0
    %209 = vmatprep.subr.mxu0 0.0
    %210 = vmatpush1.msra.mxu0 0.0
    %211 = vmatprep.subr.mxu0 0.0
    %212 = vmatpush1.msra.mxu0 0.0
    %213 = vmatprep.subr.mxu0 0.0
    %214 = vmatpush1.msra.mxu0 0.0
    %215 = vmatprep.subr.mxu0 0.0
    %216 = vmatpush1.msra.mxu0 0.0
    %217 = vmatprep.subr.mxu0 0.0
    %218 = vmatpush1.msra.mxu0 0.0
    %219 = vmatprep.subr.mxu0 0.0
    %220 = vmatpush1.msra.mxu0 0.0
    %221 = vmatprep.subr.mxu0 0.0
    %222 = vmatpush1.msra.mxu0 0.0
    %223 = vmatprep.subr.mxu0 0.0
    %224 = vmatpush1.msra.mxu0 0.0
    %225 = vmatprep.subr.mxu0 0.0
    %226 = vmatpush1.msra.mxu0 0.0
    %227 = vmatprep.subr.mxu0 0.0
    %228 = vmatpush1.msra.mxu0 0.0
    %229 = vmatprep.subr.mxu0 0.0
    %230 = vmatpush1.msra.mxu0 0.0
    %231 = vmatprep.subr.mxu0 0.0
    %232 = vmatpush1.msra.mxu0 0.0
    %233 = vmatprep.subr.mxu0 0.0
    %234 = vmatpush1.msra.mxu0 0.0
    %235 = vmatprep.subr.mxu0 0.0
    %236 = vmatpush1.msra.mxu0 0.0
    %237 = vmatprep.mubr.f32.mxu0 0.0
    %238 = vmatmul.mubr.f32.gmra.mrb[0].mxu0 %v171
    %v239 = vpop.f32.mrb[0].mxu0
    %v240 = vadd.f32 %v167, %v239
    %v241 = vpop.f32.mrb[0].mxu0
    %242 = vdwg.mxu0
    %v243 = vmax.f32 %v240, 0.0
    %v244 = vmin.f32 %v243, 1.0
    %v245 = vld [vmem:[%s5] sm:$0xff]
    %v246 = vld [vmem:[%s5 + $0x8] sm:$0xff]
    %v247 = vld [vmem:[%s6] sm:$0x1]
    %v249 = vlaneseq
    %v250 = vshrl.u32 %v249, 7
    %v251 = vsub.s32 0, %v250
    %v252 = vrot.slane %v247, %v251
    %vm254 = vcmask 130048
    %v256 = vsel %vm254, %v244, 0
    %258 = vmatprep.subr.mxu0 0.0
    %259 = vmatpush1.msra.mxu0 %v245
    %260 = vmatprep.subr.mxu0 0.0
    %261 = vmatpush1.msra.mxu0 %v246
    %262 = vmatprep.subr.mxu0 0.0
    %263 = vmatpush1.msra.mxu0 0.0
    %264 = vmatprep.subr.mxu0 0.0
    %265 = vmatpush1.msra.mxu0 0.0
    %266 = vmatprep.subr.mxu0 0.0
    %267 = vmatpush1.msra.mxu0 0.0
    %268 = vmatprep.subr.mxu0 0.0
    %269 = vmatpush1.msra.mxu0 0.0
    %270 = vmatprep.subr.mxu0 0.0
    %271 = vmatpush1.msra.mxu0 0.0
    %272 = vmatprep.subr.mxu0 0.0
    %273 = vmatpush1.msra.mxu0 0.0
    %274 = vmatprep.subr.mxu0 0.0
    %275 = vmatpush1.msra.mxu0 0.0
    %276 = vmatprep.subr.mxu0 0.0
    %277 = vmatpush1.msra.mxu0 0.0
    %278 = vmatprep.subr.mxu0 0.0
    %279 = vmatpush1.msra.mxu0 0.0
    %280 = vmatprep.subr.mxu0 0.0
    %281 = vmatpush1.msra.mxu0 0.0
    %282 = vmatprep.subr.mxu0 0.0
    %283 = vmatpush1.msra.mxu0 0.0
    %284 = vmatprep.subr.mxu0 0.0
    %285 = vmatpush1.msra.mxu0 0.0
    %286 = vmatprep.subr.mxu0 0.0
    %287 = vmatpush1.msra.mxu0 0.0
    %288 = vmatprep.subr.mxu0 0.0
    %289 = vmatpush1.msra.mxu0 0.0
    %290 = vmatprep.subr.mxu0 0.0
    %291 = vmatpush1.msra.mxu0 0.0
    %292 = vmatprep.subr.mxu0 0.0
    %293 = vmatpush1.msra.mxu0 0.0
    %294 = vmatprep.subr.mxu0 0.0
    %295 = vmatpush1.msra.mxu0 0.0
    %296 = vmatprep.subr.mxu0 0.0
    %297 = vmatpush1.msra.mxu0 0.0
    %298 = vmatprep.subr.mxu0 0.0
    %299 = vmatpush1.msra.mxu0 0.0
    %300 = vmatprep.subr.mxu0 0.0
    %301 = vmatpush1.msra.mxu0 0.0
    %302 = vmatprep.subr.mxu0 0.0
    %303 = vmatpush1.msra.mxu0 0.0
    %304 = vmatprep.subr.mxu0 0.0
    %305 = vmatpush1.msra.mxu0 0.0
    %306 = vmatprep.subr.mxu0 0.0
    %307 = vmatpush1.msra.mxu0 0.0
    %308 = vmatprep.subr.mxu0 0.0
    %309 = vmatpush1.msra.mxu0 0.0
    %310 = vmatprep.subr.mxu0 0.0
    %311 = vmatpush1.msra.mxu0 0.0
    %312 = vmatprep.subr.mxu0 0.0
    %313 = vmatpush1.msra.mxu0 0.0
    %314 = vmatprep.subr.mxu0 0.0
    %315 = vmatpush1.msra.mxu0 0.0
    %316 = vmatprep.subr.mxu0 0.0
    %317 = vmatpush1.msra.mxu0 0.0
    %318 = vmatprep.subr.mxu0 0.0
    %319 = vmatpush1.msra.mxu0 0.0
    %320 = vmatprep.subr.mxu0 0.0
    %321 = vmatpush1.msra.mxu0 0.0
    %322 = vmatprep.mubr.f32.mxu0 0.0
    %323 = vmatmul.mubr.f32.gmra.mrb[0].mxu0 %v256
    %v324 = vpop.f32.mrb[0].mxu0
    %v325 = vadd.f32 %v252, %v324
    %v326 = vpop.f32.mrb[0].mxu0
    %327 = vdwg.mxu0
    %v328 = vmax.f32 %v325, 0.0
    %v329 = vmin.f32 %v328, 1.0
    %vm330 = vcmask 64512
    %331 = vst.msk [vmem:[#allocation8] sm:$0xff] %vm330, %v329
    // Predicated region
    $region42: #{_forward_impl.1} parent=1 // pred_check
      _
    $region43: #{_forward_impl.1} parent=1 // pred_check_branch
      %333 = sbr.rel (0) target = $region45
    $region44: #{_forward_impl.1} parent=1 // pred_region
      %s335 = ssub.s32 128, 128
      %336 = vsyncadd [#allocation4], %s335
      %s338 = sshll.u32 [#allocation8], 4
      %s339 = int_to_ptr.vmem [resolvable:$true] %s338
      %341 = dma.vmem_to_hbm [thread:$0]  %s339, 128, %s7, [#allocation4]
    $region45: #{_forward_impl.1} parent=1 // pred_fallthru
      _
    // Predicated region
    $region46: #{_forward_impl.1} parent=1 // pred_check
      _
    $region47: #{_forward_impl.1} parent=1 // pred_check_branch
      %343 = sbr.rel (0) target = $region49
    $region48: #{_forward_impl.1} parent=1 // pred_region
      %344 = dma.done [#allocation4], 128
    $region49: #{_forward_impl.1} parent=1 // pred_fallthru
      _
    %345 = vsyncpa [#allocation3], 1
    %346 = vsyncpa [#allocation6], 1
    %347 = vsyncpa [#allocation4], 1

</llo_original>
